<compile_context>
chip_gen: v7x
topology: tpu7x:2x2x1
jax: 0.10.0
libtpu: 0.0.40
codegen_flags: <defaults>
</compile_context>

<pallas_src>
import jax
import jax.numpy as jnp
from jax import lax
from jax.experimental import pallas as pl
from jax.experimental.pallas import tpu as pltpu


# ---------------------------------------------------------------------------
# Kernel
# ---------------------------------------------------------------------------
def _resblock_kernel(x_ref, s1_ref, t1_ref, wt1_ref,
                     s2_ref, t2_ref, wt2_ref, b2_ref,
                     o_ref, pad1, pad2):
    """One image per grid step, lane-dense (H, W*C) activations.

    x_ref  : (1, H, W*C)          input slab (NHWC flattened over (W, C))
    s1/t1  : (1, W*C)             folded BN1 scale/shift, tiled over W
    wt1    : (3, W*Cin, W*Cout)   width-Toeplitz conv1 weights (one per kh)
    s2/t2  : (1, W*C)             folded BN2 scale / (shift + s2*b1), tiled
    wt2    : (3, W*C, W*C)        width-Toeplitz conv2 weights
    b2     : (1, W*C)             conv2 bias, tiled over W
    o_ref  : (1, H, W*C)          output slab
    pad1/2 : VMEM (H+2, W*C)      row-padded activations (zero halo rows)
    """
    H = x_ref.shape[1]
    WC = x_ref.shape[2]

    # Re-zero only the two halo rows; the interior is fully rewritten below.
    zrow = jnp.zeros((1, WC), jnp.float32)
    pad1[pl.ds(0, 1), :] = zrow
    pad1[pl.ds(H + 1, 1), :] = zrow
    pad2[pl.ds(0, 1), :] = zrow
    pad2[pl.ds(H + 1, 1), :] = zrow

    x = x_ref[0].astype(jnp.float32)                         # (H, W*C)

    # ---- BN1 (eval, folded) + ReLU -- lane-dense elementwise ----------------
    h1 = jnp.maximum(x * s1_ref[...] + t1_ref[...], 0.0)
    pad1[pl.ds(1, H), :] = h1                                # interior rows

    # ---- conv1: 3 row-shifted (H, W*Cin) x (W*Cin, W*Cout) MXU matmuls ------
    acc = jnp.zeros((H, WC), jnp.float32)
    for kh in range(3):
        acc = acc + jnp.dot(pad1[pl.ds(kh, H), :], wt1_ref[kh],
                            preferred_element_type=jnp.float32)
    # (conv1 bias is folded into t2 on the host.)

    # ---- BN2 (eval, folded, includes conv1 bias) + ReLU ---------------------
    h2 = jnp.maximum(acc * s2_ref[...] + t2_ref[...], 0.0)
    pad2[pl.ds(1, H), :] = h2

    # ---- conv2 --------------------------------------------------------------
    acc2 = jnp.zeros((H, WC), jnp.float32)
    for kh in range(3):
        acc2 = acc2 + jnp.dot(pad2[pl.ds(kh, H), :], wt2_ref[kh],
                              preferred_element_type=jnp.float32)

    # ---- conv2 bias + identity shortcut (stride=1, downsample=None) ---------
    o_ref[0] = (acc2 + b2_ref[...] + x).astype(o_ref.dtype)


# ---------------------------------------------------------------------------
# Host-side parameter folding / re-layout
# ---------------------------------------------------------------------------
def _toeplitz_conv_weights(w_hwio, W):
    """Expand a 3x3 HWIO conv weight into width-Toeplitz form.

    Returns wt of shape (3, W*Cin, W*Cout) with
        wt[kh, wi*Cin + ci, wo*Cout + co] = w_hwio[kh, wi - wo + 1, ci, co]
    for 0 <= wi - wo + 1 < 3 and zero elsewhere, so that
        conv_out[h, wo, :] = sum_kh  padded_row[h + kh] @ wt[kh]
    reproduces a stride-1, padding-1 convolution along the width axis (the
    zero column-padding is absorbed by the zero Toeplitz entries).
    """
    KH, KW, Cin, Cout = w_hwio.shape
    wt = jnp.zeros((KH, W * Cin, W * Cout), w_hwio.dtype)
    for kw in range(KW):
        for wo in range(W):
            wi = wo + kw - 1
            if 0 <= wi < W:
                wt = wt.at[:, wi * Cin:(wi + 1) * Cin,
                           wo * Cout:(wo + 1) * Cout].set(w_hwio[:, kw])
    return wt


def prepare_resblock_params(w1_oihw, b1, g1, be1, m1, v1,
                            w2_oihw, b2, g2, be2, m2, v2, W, eps=1e-5):
    """Fold eval-mode BN + conv1 bias, tile per-channel vectors lane-dense,
    and build the width-Toeplitz conv weights (all host-side, done once)."""
    s1 = g1 / jnp.sqrt(v1 + eps)
    t1 = be1 - m1 * s1
    s2 = g2 / jnp.sqrt(v2 + eps)
    t2 = be2 - m2 * s2 + s2 * b1            # fold conv1 bias into BN2 shift

    w1_hwio = jnp.transpose(w1_oihw, (2, 3, 1, 0))   # OIHW -> HWIO
    w2_hwio = jnp.transpose(w2_oihw, (2, 3, 1, 0))
    wt1 = _toeplitz_conv_weights(w1_hwio, W)
    wt2 = _toeplitz_conv_weights(w2_hwio, W)

    tile = lambda v: jnp.tile(v, W)[None, :]          # (C,) -> (1, W*C)
    return (tile(s1), tile(t1), wt1, tile(s2), tile(t2), wt2, tile(b2))


# ---------------------------------------------------------------------------
# Forward wrapper
# ---------------------------------------------------------------------------
@jax.jit
def resblock_forward(x_nchw, s1t, t1t, wt1, s2t, t2t, wt2, b2t):
    """x_nchw: (N, C, H, W) float32. Returns (N, C, H, W)."""
    N, C, H, W = x_nchw.shape
    WC = W * C                               # identity shortcut => Cin == Cout
    # NCHW -> lane-dense (N, H, W*C); for the demo shape W*C = 128 lanes.
    x = jnp.transpose(x_nchw, (0, 2, 3, 1)).reshape(N, H, WC)

    out = pl.pallas_call(
        _resblock_kernel,
        out_shape=jax.ShapeDtypeStruct((N, H, WC), x.dtype),
        grid_spec=pltpu.PrefetchScalarGridSpec(
            num_scalar_prefetch=0,
            grid=(N,),                       # one image / step; "parallel" so
                                             # both v7x TensorCores get work.
            in_specs=[
                pl.BlockSpec((1, H, WC), lambda n: (n, 0, 0)),
                pl.BlockSpec((1, WC), lambda n: (0, 0)),
                pl.BlockSpec((1, WC), lambda n: (0, 0)),
                pl.BlockSpec((3, WC, WC), lambda n: (0, 0, 0)),
                pl.BlockSpec((1, WC), lambda n: (0, 0)),
                pl.BlockSpec((1, WC), lambda n: (0, 0)),
                pl.BlockSpec((3, WC, WC), lambda n: (0, 0, 0)),
                pl.BlockSpec((1, WC), lambda n: (0, 0)),
            ],
            out_specs=pl.BlockSpec((1, H, WC), lambda n: (n, 0, 0)),
            scratch_shapes=[
                pltpu.VMEM((H + 2, WC), jnp.float32),   # conv1 row-padded act
                pltpu.VMEM((H + 2, WC), jnp.float32),   # conv2 row-padded act
            ],
        ),
        compiler_params=pltpu.CompilerParams(
            dimension_semantics=("parallel",),
            vmem_limit_bytes=32 * 1024 * 1024),
    )(x, s1t, t1t, wt1, s2t, t2t, wt2, b2t)

    return jnp.transpose(out.reshape(N, H, W, C), (0, 3, 1, 2))   # -> NCHW


# ---------------------------------------------------------------------------
# Pure-JAX reference (same math, NCHW like PyTorch) for correctness checking.
# ---------------------------------------------------------------------------
def resblock_ref(x, g1, be1, m1, v1, w1_oihw, b1, g2, be2, m2, v2, w2_oihw, b2,
                 eps=1e-5):
    def bn(v, g, b, m, s):
        return ((v - m[None, :, None, None])
                / jnp.sqrt(s[None, :, None, None] + eps)
                * g[None, :, None, None] + b[None, :, None, None])

    def conv(v, w, b):
        y = lax.conv_general_dilated(
            v, w, (1, 1), ((1, 1), (1, 1)),
            dimension_numbers=("NCHW", "OIHW", "NCHW"))
        return y + b[None, :, None, None]

    h = jax.nn.relu(bn(x, g1, be1, m1, v1))
    h = conv(h, w1_oihw, b1)
    h = jax.nn.relu(bn(h, g2, be2, m2, v2))
    h = conv(h, w2_oihw, b2)
    return h + x


if __name__ == "__main__":
    key = jax.random.PRNGKey(0)
    N, C, H, W = 2, 8, 16, 16          # inplanes = planes = 8  (W*C = 128)
    planes = C
    ks = jax.random.split(key, 12)

    x = jax.random.normal(ks[0], (N, C, H, W), jnp.float32)

    # Conv parameters (PyTorch OIHW layout), deterministic synthetic init.
    w1 = jax.random.normal(ks[1], (planes, C, 3, 3), jnp.float32) * 0.1
    b1 = jax.random.normal(ks[2], (planes,), jnp.float32) * 0.1
    w2 = jax.random.normal(ks[3], (planes, planes, 3, 3), jnp.float32) * 0.1
    b2 = jax.random.normal(ks[4], (planes,), jnp.float32) * 0.1

    # BatchNorm (eval-mode) parameters.
    eps = 1e-5
    g1 = 1.0 + 0.1 * jax.random.normal(ks[5], (C,), jnp.float32)
    be1 = 0.1 * jax.random.normal(ks[6], (C,), jnp.float32)
    m1 = 0.1 * jax.random.normal(ks[7], (C,), jnp.float32)
    v1 = jnp.abs(jax.random.normal(ks[8], (C,), jnp.float32)) + 0.5
    g2 = 1.0 + 0.1 * jax.random.normal(ks[9], (planes,), jnp.float32)
    be2 = 0.1 * jax.random.normal(ks[10], (planes,), jnp.float32)
    m2 = 0.1 * jax.random.normal(ks[11], (planes,), jnp.float32)
    v2 = jnp.full((planes,), 1.3, jnp.float32)

    params = prepare_resblock_params(w1, b1, g1, be1, m1, v1,
                                     w2, b2, g2, be2, m2, v2, W, eps)

    out = resblock_forward(x, *params)
    out = jax.block_until_ready(out)

    ref = resblock_ref(x, g1, be1, m1, v1, w1, b1, g2, be2, m2, v2, w2, b2, eps)
    assert out.shape == ref.shape == (N, C, H, W)
    max_err = float(jnp.max(jnp.abs(out - ref)))
    assert max_err < 1e-3, f"mismatch vs reference, max abs err = {max_err}"

    print("KERNEL_OK")
</pallas_src>

<mosaic_0001>
module attributes {stable_mosaic.version = 11 : i64} {
  func.func @_resblock_kernel(%arg0: i32, %arg1: memref<1x16x128xf32, #tpu.memory_space<vmem>>, %arg2: memref<1x128xf32, #tpu.memory_space<vmem>>, %arg3: memref<1x128xf32, #tpu.memory_space<vmem>>, %arg4: memref<3x128x128xf32, #tpu.memory_space<vmem>>, %arg5: memref<1x128xf32, #tpu.memory_space<vmem>>, %arg6: memref<1x128xf32, #tpu.memory_space<vmem>>, %arg7: memref<3x128x128xf32, #tpu.memory_space<vmem>>, %arg8: memref<1x128xf32, #tpu.memory_space<vmem>>, %arg9: memref<1x16x128xf32, #tpu.memory_space<vmem>>, %arg10: memref<18x128xf32, #tpu.memory_space<vmem>>, %arg11: memref<18x128xf32, #tpu.memory_space<vmem>>) attributes {dimension_semantics = [#tpu.dimension_semantics<parallel>], iteration_bounds = array<i64: 2>, scalar_prefetch = 0 : i64, scratch_operands = 2 : i64, tpu.core_type = #tpu.core_type<tc>, window_params = [{transform_indices = @transform_0, window_bounds = array<i64: 1, 16, 128>}, {pipeline_mode = #tpu.pipeline_mode<synchronous>, transform_indices = @transform_1, window_bounds = array<i64: 1, 128>}, {pipeline_mode = #tpu.pipeline_mode<synchronous>, transform_indices = @transform_2, window_bounds = array<i64: 1, 128>}, {pipeline_mode = #tpu.pipeline_mode<synchronous>, transform_indices = @transform_3, window_bounds = array<i64: 3, 128, 128>}, {pipeline_mode = #tpu.pipeline_mode<synchronous>, transform_indices = @transform_4, window_bounds = array<i64: 1, 128>}, {pipeline_mode = #tpu.pipeline_mode<synchronous>, transform_indices = @transform_5, window_bounds = array<i64: 1, 128>}, {pipeline_mode = #tpu.pipeline_mode<synchronous>, transform_indices = @transform_6, window_bounds = array<i64: 3, 128, 128>}, {pipeline_mode = #tpu.pipeline_mode<synchronous>, transform_indices = @transform_7, window_bounds = array<i64: 1, 128>}, {transform_indices = @transform_8, window_bounds = array<i64: 1, 16, 128>}]} {
    %cst = arith.constant 0.000000e+00 : f32
    %0 = vector.broadcast %cst : f32 to vector<1x128xf32>
    %c0 = arith.constant 0 : index
    %c0_0 = arith.constant 0 : index
    %1 = vector.load %arg10[%c0, %c0_0] : memref<18x128xf32, #tpu.memory_space<vmem>>, vector<1x128xf32>
    tpu.vector_store %arg10[%c0, %c0_0], %0 {strides = array<i32>} : memref<18x128xf32, #tpu.memory_space<vmem>>, vector<1x128xf32>,
    %c17 = arith.constant 17 : index
    %c0_1 = arith.constant 0 : index
    %2 = vector.load %arg10[%c17, %c0_1] : memref<18x128xf32, #tpu.memory_space<vmem>>, vector<1x128xf32>
    tpu.vector_store %arg10[%c17, %c0_1], %0 {strides = array<i32>} : memref<18x128xf32, #tpu.memory_space<vmem>>, vector<1x128xf32>,
    %c0_2 = arith.constant 0 : index
    %c0_3 = arith.constant 0 : index
    %3 = vector.load %arg11[%c0_2, %c0_3] : memref<18x128xf32, #tpu.memory_space<vmem>>, vector<1x128xf32>
    tpu.vector_store %arg11[%c0_2, %c0_3], %0 {strides = array<i32>} : memref<18x128xf32, #tpu.memory_space<vmem>>, vector<1x128xf32>,
    %c17_4 = arith.constant 17 : index
    %c0_5 = arith.constant 0 : index
    %4 = vector.load %arg11[%c17_4, %c0_5] : memref<18x128xf32, #tpu.memory_space<vmem>>, vector<1x128xf32>
    tpu.vector_store %arg11[%c17_4, %c0_5], %0 {strides = array<i32>} : memref<18x128xf32, #tpu.memory_space<vmem>>, vector<1x128xf32>,
    %c0_6 = arith.constant 0 : index
    %c0_7 = arith.constant 0 : index
    %c0_8 = arith.constant 0 : index
    %5 = vector.load %arg1[%c0_6, %c0_7, %c0_8] : memref<1x16x128xf32, #tpu.memory_space<vmem>>, vector<1x16x128xf32>
    %6 = vector.shape_cast %5 : vector<1x16x128xf32> to vector<16x128xf32>
    %c0_9 = arith.constant 0 : index
    %c0_10 = arith.constant 0 : index
    %7 = vector.load %arg2[%c0_9, %c0_10] : memref<1x128xf32, #tpu.memory_space<vmem>>, vector<1x128xf32>
    %8 = vector.broadcast %7 : vector<1x128xf32> to vector<16x128xf32>
    %9 = arith.mulf %6, %8 : vector<16x128xf32>
    %c0_11 = arith.constant 0 : index
    %c0_12 = arith.constant 0 : index
    %10 = vector.load %arg3[%c0_11, %c0_12] : memref<1x128xf32, #tpu.memory_space<vmem>>, vector<1x128xf32>
    %11 = vector.broadcast %10 : vector<1x128xf32> to vector<16x128xf32>
    %12 = arith.addf %9, %11 : vector<16x128xf32>
    %cst_13 = arith.constant 0.000000e+00 : f32
    %13 = vector.broadcast %cst_13 : f32 to vector<16x128xf32>
    %14 = arith.maximumf %12, %13 : vector<16x128xf32>
    %c1 = arith.constant 1 : index
    %c0_14 = arith.constant 0 : index
    %15 = vector.load %arg10[%c1, %c0_14] : memref<18x128xf32, #tpu.memory_space<vmem>>, vector<16x128xf32>
    tpu.vector_store %arg10[%c1, %c0_14], %14 {strides = array<i32>} : memref<18x128xf32, #tpu.memory_space<vmem>>, vector<16x128xf32>,
    %cst_15 = arith.constant 0.000000e+00 : f32
    %16 = vector.broadcast %cst_15 : f32 to vector<16x128xf32>
    %c0_16 = arith.constant 0 : index
    %c0_17 = arith.constant 0 : index
    %17 = vector.load %arg10[%c0_16, %c0_17] : memref<18x128xf32, #tpu.memory_space<vmem>>, vector<16x128xf32>
    %c0_18 = arith.constant 0 : index
    %c0_19 = arith.constant 0 : index
    %c0_20 = arith.constant 0 : index
    %18 = vector.load %arg4[%c0_18, %c0_19, %c0_20] : memref<3x128x128xf32, #tpu.memory_space<vmem>>, vector<1x128x128xf32>
    %19 = vector.shape_cast %18 : vector<1x128x128xf32> to vector<128x128xf32>
    %cst_21 = arith.constant dense<0.000000e+00> : vector<16x128xf32>
    %20 = tpu.matmul %17, %19, %cst_21 {dimension_numbers = #tpu.dot_dimension_numbers<[1], [0], [0], [1], [0, 0, 1, 1], [], []>} : vector<16x128xf32>, vector<128x128xf32>, vector<16x128xf32> -> vector<16x128xf32>
    %21 = arith.addf %16, %20 : vector<16x128xf32>
    %c1_22 = arith.constant 1 : index
    %c0_23 = arith.constant 0 : index
    %22 = vector.load %arg10[%c1_22, %c0_23] : memref<18x128xf32, #tpu.memory_space<vmem>>, vector<16x128xf32>
    %c1_24 = arith.constant 1 : index
    %c0_25 = arith.constant 0 : index
    %c0_26 = arith.constant 0 : index
    %23 = vector.load %arg4[%c1_24, %c0_25, %c0_26] : memref<3x128x128xf32, #tpu.memory_space<vmem>>, vector<1x128x128xf32>
    %24 = vector.shape_cast %23 : vector<1x128x128xf32> to vector<128x128xf32>
    %cst_27 = arith.constant dense<0.000000e+00> : vector<16x128xf32>
    %25 = tpu.matmul %22, %24, %cst_27 {dimension_numbers = #tpu.dot_dimension_numbers<[1], [0], [0], [1], [0, 0, 1, 1], [], []>} : vector<16x128xf32>, vector<128x128xf32>, vector<16x128xf32> -> vector<16x128xf32>
    %26 = arith.addf %21, %25 : vector<16x128xf32>
    %c2 = arith.constant 2 : index
    %c0_28 = arith.constant 0 : index
    %27 = vector.load %arg10[%c2, %c0_28] : memref<18x128xf32, #tpu.memory_space<vmem>>, vector<16x128xf32>
    %c2_29 = arith.constant 2 : index
    %c0_30 = arith.constant 0 : index
    %c0_31 = arith.constant 0 : index
    %28 = vector.load %arg4[%c2_29, %c0_30, %c0_31] : memref<3x128x128xf32, #tpu.memory_space<vmem>>, vector<1x128x128xf32>
    %29 = vector.shape_cast %28 : vector<1x128x128xf32> to vector<128x128xf32>
    %cst_32 = arith.constant dense<0.000000e+00> : vector<16x128xf32>
    %30 = tpu.matmul %27, %29, %cst_32 {dimension_numbers = #tpu.dot_dimension_numbers<[1], [0], [0], [1], [0, 0, 1, 1], [], []>} : vector<16x128xf32>, vector<128x128xf32>, vector<16x128xf32> -> vector<16x128xf32>
    %31 = arith.addf %26, %30 : vector<16x128xf32>
    %c0_33 = arith.constant 0 : index
    %c0_34 = arith.constant 0 : index
    %32 = vector.load %arg5[%c0_33, %c0_34] : memref<1x128xf32, #tpu.memory_space<vmem>>, vector<1x128xf32>
    %33 = vector.broadcast %32 : vector<1x128xf32> to vector<16x128xf32>
    %34 = arith.mulf %31, %33 : vector<16x128xf32>
    %c0_35 = arith.constant 0 : index
    %c0_36 = arith.constant 0 : index
    %35 = vector.load %arg6[%c0_35, %c0_36] : memref<1x128xf32, #tpu.memory_space<vmem>>, vector<1x128xf32>
    %36 = vector.broadcast %35 : vector<1x128xf32> to vector<16x128xf32>
    %37 = arith.addf %34, %36 : vector<16x128xf32>
    %cst_37 = arith.constant 0.000000e+00 : f32
    %38 = vector.broadcast %cst_37 : f32 to vector<16x128xf32>
    %39 = arith.maximumf %37, %38 : vector<16x128xf32>
    %c1_38 = arith.constant 1 : index
    %c0_39 = arith.constant 0 : index
    %40 = vector.load %arg11[%c1_38, %c0_39] : memref<18x128xf32, #tpu.memory_space<vmem>>, vector<16x128xf32>
    tpu.vector_store %arg11[%c1_38, %c0_39], %39 {strides = array<i32>} : memref<18x128xf32, #tpu.memory_space<vmem>>, vector<16x128xf32>,
    %cst_40 = arith.constant 0.000000e+00 : f32
    %41 = vector.broadcast %cst_40 : f32 to vector<16x128xf32>
    %c0_41 = arith.constant 0 : index
    %c0_42 = arith.constant 0 : index
    %42 = vector.load %arg11[%c0_41, %c0_42] : memref<18x128xf32, #tpu.memory_space<vmem>>, vector<16x128xf32>
    %c0_43 = arith.constant 0 : index
    %c0_44 = arith.constant 0 : index
    %c0_45 = arith.constant 0 : index
    %43 = vector.load %arg7[%c0_43, %c0_44, %c0_45] : memref<3x128x128xf32, #tpu.memory_space<vmem>>, vector<1x128x128xf32>
    %44 = vector.shape_cast %43 : vector<1x128x128xf32> to vector<128x128xf32>
    %cst_46 = arith.constant dense<0.000000e+00> : vector<16x128xf32>
    %45 = tpu.matmul %42, %44, %cst_46 {dimension_numbers = #tpu.dot_dimension_numbers<[1], [0], [0], [1], [0, 0, 1, 1], [], []>} : vector<16x128xf32>, vector<128x128xf32>, vector<16x128xf32> -> vector<16x128xf32>
    %46 = arith.addf %41, %45 : vector<16x128xf32>
    %c1_47 = arith.constant 1 : index
    %c0_48 = arith.constant 0 : index
    %47 = vector.load %arg11[%c1_47, %c0_48] : memref<18x128xf32, #tpu.memory_space<vmem>>, vector<16x128xf32>
    %c1_49 = arith.constant 1 : index
    %c0_50 = arith.constant 0 : index
    %c0_51 = arith.constant 0 : index
    %48 = vector.load %arg7[%c1_49, %c0_50, %c0_51] : memref<3x128x128xf32, #tpu.memory_space<vmem>>, vector<1x128x128xf32>
    %49 = vector.shape_cast %48 : vector<1x128x128xf32> to vector<128x128xf32>
    %cst_52 = arith.constant dense<0.000000e+00> : vector<16x128xf32>
    %50 = tpu.matmul %47, %49, %cst_52 {dimension_numbers = #tpu.dot_dimension_numbers<[1], [0], [0], [1], [0, 0, 1, 1], [], []>} : vector<16x128xf32>, vector<128x128xf32>, vector<16x128xf32> -> vector<16x128xf32>
    %51 = arith.addf %46, %50 : vector<16x128xf32>
    %c2_53 = arith.constant 2 : index
    %c0_54 = arith.constant 0 : index
    %52 = vector.load %arg11[%c2_53, %c0_54] : memref<18x128xf32, #tpu.memory_space<vmem>>, vector<16x128xf32>
    %c2_55 = arith.constant 2 : index
    %c0_56 = arith.constant 0 : index
    %c0_57 = arith.constant 0 : index
    %53 = vector.load %arg7[%c2_55, %c0_56, %c0_57] : memref<3x128x128xf32, #tpu.memory_space<vmem>>, vector<1x128x128xf32>
    %54 = vector.shape_cast %53 : vector<1x128x128xf32> to vector<128x128xf32>
    %cst_58 = arith.constant dense<0.000000e+00> : vector<16x128xf32>
    %55 = tpu.matmul %52, %54, %cst_58 {dimension_numbers = #tpu.dot_dimension_numbers<[1], [0], [0], [1], [0, 0, 1, 1], [], []>} : vector<16x128xf32>, vector<128x128xf32>, vector<16x128xf32> -> vector<16x128xf32>
    %56 = arith.addf %51, %55 : vector<16x128xf32>
    %c0_59 = arith.constant 0 : index
    %c0_60 = arith.constant 0 : index
    %57 = vector.load %arg8[%c0_59, %c0_60] : memref<1x128xf32, #tpu.memory_space<vmem>>, vector<1x128xf32>
    %58 = vector.broadcast %57 : vector<1x128xf32> to vector<16x128xf32>
    %59 = arith.addf %56, %58 : vector<16x128xf32>
    %60 = arith.addf %59, %6 : vector<16x128xf32>
    %c0_61 = arith.constant 0 : index
    %c0_62 = arith.constant 0 : index
    %c0_63 = arith.constant 0 : index
    %61 = vector.load %arg9[%c0_61, %c0_62, %c0_63] : memref<1x16x128xf32, #tpu.memory_space<vmem>>, vector<1x16x128xf32>
    %62 = vector.shape_cast %61 : vector<1x16x128xf32> to vector<16x128xf32>
    %63 = vector.shape_cast %60 : vector<16x128xf32> to vector<1x16x128xf32>
    tpu.vector_store %arg9[%c0_61, %c0_62, %c0_63], %63 {strides = array<i32>} : memref<1x16x128xf32, #tpu.memory_space<vmem>>, vector<1x16x128xf32>,
    return
  }
  func.func @transform_0(%arg0: i32) -> (i32, i32, i32) {
    %c0_i32 = arith.constant 0 : i32
    %c0_i32_0 = arith.constant 0 : i32
    %c0_i32_1 = arith.constant 0 : i32
    return %arg0, %c0_i32, %c0_i32_0 : i32, i32, i32
  }
  func.func @transform_1(%arg0: i32) -> (i32, i32) {
    %c0_i32 = arith.constant 0 : i32
    %c0_i32_0 = arith.constant 0 : i32
    %c0_i32_1 = arith.constant 0 : i32
    return %c0_i32, %c0_i32_0 : i32, i32
  }
  func.func @transform_2(%arg0: i32) -> (i32, i32) {
    %c0_i32 = arith.constant 0 : i32
    %c0_i32_0 = arith.constant 0 : i32
    %c0_i32_1 = arith.constant 0 : i32
    return %c0_i32, %c0_i32_0 : i32, i32
  }
  func.func @transform_3(%arg0: i32) -> (i32, i32, i32) {
    %c0_i32 = arith.constant 0 : i32
    %c0_i32_0 = arith.constant 0 : i32
    %c0_i32_1 = arith.constant 0 : i32
    %c0_i32_2 = arith.constant 0 : i32
    return %c0_i32, %c0_i32_0, %c0_i32_1 : i32, i32, i32
  }
  func.func @transform_4(%arg0: i32) -> (i32, i32) {
    %c0_i32 = arith.constant 0 : i32
    %c0_i32_0 = arith.constant 0 : i32
    %c0_i32_1 = arith.constant 0 : i32
    return %c0_i32, %c0_i32_0 : i32, i32
  }
  func.func @transform_5(%arg0: i32) -> (i32, i32) {
    %c0_i32 = arith.constant 0 : i32
    %c0_i32_0 = arith.constant 0 : i32
    %c0_i32_1 = arith.constant 0 : i32
    return %c0_i32, %c0_i32_0 : i32, i32
  }
  func.func @transform_6(%arg0: i32) -> (i32, i32, i32) {
    %c0_i32 = arith.constant 0 : i32
    %c0_i32_0 = arith.constant 0 : i32
    %c0_i32_1 = arith.constant 0 : i32
    %c0_i32_2 = arith.constant 0 : i32
    return %c0_i32, %c0_i32_0, %c0_i32_1 : i32, i32, i32
  }
  func.func @transform_7(%arg0: i32) -> (i32, i32) {
    %c0_i32 = arith.constant 0 : i32
    %c0_i32_0 = arith.constant 0 : i32
    %c0_i32_1 = arith.constant 0 : i32
    return %c0_i32, %c0_i32_0 : i32, i32
  }
  func.func @transform_8(%arg0: i32) -> (i32, i32, i32) {
    %c0_i32 = arith.constant 0 : i32
    %c0_i32_0 = arith.constant 0 : i32
    %c0_i32_1 = arith.constant 0 : i32
    return %arg0, %c0_i32, %c0_i32_0 : i32, i32, i32
  }
}

</mosaic_0001>

<llo_original>
// kernel: resblock_forward.1
$region0: #{resblock_forward.1}
  #allocation0 [shape = 'u32[]', space=smem, size = 0x4, offset = 0x4, fixed_abs, tag = 'smem constant byte address 0x4 - core index']
  #allocation1 [shape = 'u32[144,128]{1,0:T(1,128)}', space=vmem, size = 0x12000, scoped, tag = 'internal scratch']
  #allocation2 [shape = 'f32[18,128]{1,0:T(8,128)}', space=vmem, size = 0x3000, scoped, tag = 'scratch operand']
  #allocation3 [shape = 'f32[18,128]{1,0:T(8,128)}', space=vmem, size = 0x3000, scoped, tag = 'scratch operand']
  %s0 = inlined_call_operand.vmem [shape: f32[2,16,128], index: 0, kind: input, shape index: {}]
  %s1 = inlined_call_operand.vmem [shape: f32[1,128], index: 1, kind: input, shape index: {}]
  %s2 = inlined_call_operand.vmem [shape: f32[1,128], index: 2, kind: input, shape index: {}]
  %s3 = inlined_call_operand.vmem [shape: f32[3,128,128], index: 3, kind: input, shape index: {}]
  %s4 = inlined_call_operand.vmem [shape: f32[1,128], index: 4, kind: input, shape index: {}]
  %s5 = inlined_call_operand.vmem [shape: f32[1,128], index: 5, kind: input, shape index: {}]
  %s6 = inlined_call_operand.vmem [shape: f32[3,128,128], index: 6, kind: input, shape index: {}]
  %s7 = inlined_call_operand.vmem [shape: f32[1,128], index: 7, kind: input, shape index: {}]
  %s8 = inlined_call_operand.vmem [shape: f32[2,16,128], index: 8, kind: output, shape index: {}]
  %s9 = sld [smem:[#allocation0]]
  $region65: #{resblock_forward.1} parent=0
    _
  %s11 = ssub.s32 1, %s9
  %s12 = scalar_select 0, %s11, %s9
  loop: start=0, step=1, limit=4
  $region2: #{resblock_forward.1} parent=0 // loop_pre_header
    _
  $region3: #{resblock_forward.1} parent=0 // loop_header
    %s14 = sphi 0, %s18
    %p15 = scmp.ge.s32.totalorder %s14, 4
    %s24 = sphi 0, %s26
    %s27 = sphi 0, %s24
    %s28 = sphi 0, %s27
    %s44 = sphi 0, %s28
    %s48 = sphi 0, %s48
    %s50 = sphi 0, %s48
    %s51 = sphi 0, %s50
    %s65 = sphi 0, %s51
    %s69 = sphi 0, %s69
    %s71 = sphi 0, %s69
    %s72 = sphi 0, %s71
    %s86 = sphi 0, %s72
    %s90 = sphi 0, %s90
    %s92 = sphi 0, %s90
    %s93 = sphi 0, %s92
    %s107 = sphi 0, %s93
    %s111 = sphi 0, %s111
    %s113 = sphi 0, %s111
    %s114 = sphi 0, %s113
    %s128 = sphi 0, %s114
    %s132 = sphi 0, %s132
    %s134 = sphi 0, %s132
    %s135 = sphi 0, %s134
    %s149 = sphi 0, %s135
    %s153 = sphi 0, %s153
    %s155 = sphi 0, %s153
    %s156 = sphi 0, %s155
    %s170 = sphi 0, %s156
    %s174 = sphi 0, %s174
    %s176 = sphi 0, %s174
    %s177 = sphi 0, %s176
    %s191 = sphi 0, %s177
    %s197 = sphi 0, %s199
    %s200 = sphi 0, %s197
    %s201 = sphi 0, %s200
    %s217 = sphi 0, %s201
  $region4: #{resblock_forward.1} parent=0 // loop_header_branch
    %17 = sbr.rel (%p15) target = $region8
  $region5: #{resblock_forward.1} parent=0 // loop_body
    %s19 = ssub.s32 %s14, 1
    %s20 = ssub.s32 %s14, 2
    %s21 = sadd.s32 %s14, 1
    %s22 = ssub.s32 %s14, %s21
    %p23 = scmp.eq.s32.totalorder %s22, 0
    %s25 = sadd.s32 %s24, 1
    %s26 = scalar_select %p23, %s24, %s25
    %p29 = pneg %p23
    %p30 = scmp.eq.s32.totalorder %s14, 1
    %p31 = por %p29, %p30
    %p32 = scmp.ne.s32.totalorder %s24, %s27
    %p33 = scmp.eq.s32.totalorder %s14, 0
    %p34 = por %p32, %p33
    %p35 = scmp.ne.s32.totalorder %s24, %s27
    %p36 = scmp.eq.s32.totalorder %s19, 1
    %p37 = por %p35, %p36
    %p38 = scmp.ne.s32.totalorder %s27, %s28
    %p39 = scmp.eq.s32.totalorder %s19, 0
    %p40 = por %p38, %p39
    %p41 = scmp.ne.s32.totalorder %s27, %s28
    %p42 = scmp.eq.s32.totalorder %s20, 1
    %p43 = por %p41, %p42
    %p45 = scmp.ne.s32.totalorder %s28, %s44
    %p46 = scmp.eq.s32.totalorder %s20, 0
    %p47 = por %p45, %p46
    %s49 = sadd.s32 %s48, 1
    %p52 = scmp.eq.s32.totalorder %s14, 1
    %p53 = scmp.ne.s32.totalorder %s48, %s50
    %p54 = scmp.eq.s32.totalorder %s14, 0
    %p55 = por %p53, %p54
    %p56 = scmp.ne.s32.totalorder %s48, %s50
    %p57 = scmp.eq.s32.totalorder %s19, 1
    %p58 = por %p56, %p57
    %p59 = scmp.ne.s32.totalorder %s50, %s51
    %p60 = scmp.eq.s32.totalorder %s19, 0
    %p61 = por %p59, %p60
    %p62 = scmp.ne.s32.totalorder %s50, %s51
    %p63 = scmp.eq.s32.totalorder %s20, 1
    %p64 = por %p62, %p63
    %p66 = scmp.ne.s32.totalorder %s51, %s65
    %p67 = scmp.eq.s32.totalorder %s20, 0
    %p68 = por %p66, %p67
    %s70 = sadd.s32 %s69, 1
    %p73 = scmp.eq.s32.totalorder %s14, 1
    %p74 = scmp.ne.s32.totalorder %s69, %s71
    %p75 = scmp.eq.s32.totalorder %s14, 0
    %p76 = por %p74, %p75
    %p77 = scmp.ne.s32.totalorder %s69, %s71
    %p78 = scmp.eq.s32.totalorder %s19, 1
    %p79 = por %p77, %p78
    %p80 = scmp.ne.s32.totalorder %s71, %s72
    %p81 = scmp.eq.s32.totalorder %s19, 0
    %p82 = por %p80, %p81
    %p83 = scmp.ne.s32.totalorder %s71, %s72
    %p84 = scmp.eq.s32.totalorder %s20, 1
    %p85 = por %p83, %p84
    %p87 = scmp.ne.s32.totalorder %s72, %s86
    %p88 = scmp.eq.s32.totalorder %s20, 0
    %p89 = por %p87, %p88
    %s91 = sadd.s32 %s90, 1
    %p94 = scmp.eq.s32.totalorder %s14, 1
    %p95 = scmp.ne.s32.totalorder %s90, %s92
    %p96 = scmp.eq.s32.totalorder %s14, 0
    %p97 = por %p95, %p96
    %p98 = scmp.ne.s32.totalorder %s90, %s92
    %p99 = scmp.eq.s32.totalorder %s19, 1
    %p100 = por %p98, %p99
    %p101 = scmp.ne.s32.totalorder %s92, %s93
    %p102 = scmp.eq.s32.totalorder %s19, 0
    %p103 = por %p101, %p102
    %p104 = scmp.ne.s32.totalorder %s92, %s93
    %p105 = scmp.eq.s32.totalorder %s20, 1
    %p106 = por %p104, %p105
    %p108 = scmp.ne.s32.totalorder %s93, %s107
    %p109 = scmp.eq.s32.totalorder %s20, 0
    %p110 = por %p108, %p109
    %s112 = sadd.s32 %s111, 1
    %p115 = scmp.eq.s32.totalorder %s14, 1
    %p116 = scmp.ne.s32.totalorder %s111, %s113
    %p117 = scmp.eq.s32.totalorder %s14, 0
    %p118 = por %p116, %p117
    %p119 = scmp.ne.s32.totalorder %s111, %s113
    %p120 = scmp.eq.s32.totalorder %s19, 1
    %p121 = por %p119, %p120
    %p122 = scmp.ne.s32.totalorder %s113, %s114
    %p123 = scmp.eq.s32.totalorder %s19, 0
    %p124 = por %p122, %p123
    %p125 = scmp.ne.s32.totalorder %s113, %s114
    %p126 = scmp.eq.s32.totalorder %s20, 1
    %p127 = por %p125, %p126
    %p129 = scmp.ne.s32.totalorder %s114, %s128
    %p130 = scmp.eq.s32.totalorder %s20, 0
    %p131 = por %p129, %p130
    %s133 = sadd.s32 %s132, 1
    %p136 = scmp.eq.s32.totalorder %s14, 1
    %p137 = scmp.ne.s32.totalorder %s132, %s134
    %p138 = scmp.eq.s32.totalorder %s14, 0
    %p139 = por %p137, %p138
    %p140 = scmp.ne.s32.totalorder %s132, %s134
    %p141 = scmp.eq.s32.totalorder %s19, 1
    %p142 = por %p140, %p141
    %p143 = scmp.ne.s32.totalorder %s134, %s135
    %p144 = scmp.eq.s32.totalorder %s19, 0
    %p145 = por %p143, %p144
    %p146 = scmp.ne.s32.totalorder %s134, %s135
    %p147 = scmp.eq.s32.totalorder %s20, 1
    %p148 = por %p146, %p147
    %p150 = scmp.ne.s32.totalorder %s135, %s149
    %p151 = scmp.eq.s32.totalorder %s20, 0
    %p152 = por %p150, %p151
    %s154 = sadd.s32 %s153, 1
    %p157 = scmp.eq.s32.totalorder %s14, 1
    %p158 = scmp.ne.s32.totalorder %s153, %s155
    %p159 = scmp.eq.s32.totalorder %s14, 0
    %p160 = por %p158, %p159
    %p161 = scmp.ne.s32.totalorder %s153, %s155
    %p162 = scmp.eq.s32.totalorder %s19, 1
    %p163 = por %p161, %p162
    %p164 = scmp.ne.s32.totalorder %s155, %s156
    %p165 = scmp.eq.s32.totalorder %s19, 0
    %p166 = por %p164, %p165
    %p167 = scmp.ne.s32.totalorder %s155, %s156
    %p168 = scmp.eq.s32.totalorder %s20, 1
    %p169 = por %p167, %p168
    %p171 = scmp.ne.s32.totalorder %s156, %s170
    %p172 = scmp.eq.s32.totalorder %s20, 0
    %p173 = por %p171, %p172
    %s175 = sadd.s32 %s174, 1
    %p178 = scmp.eq.s32.totalorder %s14, 1
    %p179 = scmp.ne.s32.totalorder %s174, %s176
    %p180 = scmp.eq.s32.totalorder %s14, 0
    %p181 = por %p179, %p180
    %p182 = scmp.ne.s32.totalorder %s174, %s176
    %p183 = scmp.eq.s32.totalorder %s19, 1
    %p184 = por %p182, %p183
    %p185 = scmp.ne.s32.totalorder %s176, %s177
    %p186 = scmp.eq.s32.totalorder %s19, 0
    %p187 = por %p185, %p186
    %p188 = scmp.ne.s32.totalorder %s176, %s177
    %p189 = scmp.eq.s32.totalorder %s20, 1
    %p190 = por %p188, %p189
    %p192 = scmp.ne.s32.totalorder %s177, %s191
    %p193 = scmp.eq.s32.totalorder %s20, 0
    %p194 = por %p192, %p193
    %s195 = ssub.s32 %s14, %s21
    %p196 = scmp.eq.s32.totalorder %s195, 0
    %s198 = sadd.s32 %s197, 1
    %s199 = scalar_select %p196, %s197, %s198
    %p202 = pneg %p196
    %p203 = scmp.eq.s32.totalorder %s14, 1
    %p204 = por %p202, %p203
    %p205 = scmp.ne.s32.totalorder %s197, %s200
    %p206 = scmp.eq.s32.totalorder %s14, 0
    %p207 = por %p205, %p206
    %p208 = scmp.ne.s32.totalorder %s197, %s200
    %p209 = scmp.eq.s32.totalorder %s19, 1
    %p210 = por %p208, %p209
    %p211 = scmp.ne.s32.totalorder %s200, %s201
    %p212 = scmp.eq.s32.totalorder %s19, 0
    %p213 = por %p211, %p212
    %p214 = scmp.ne.s32.totalorder %s200, %s201
    %p215 = scmp.eq.s32.totalorder %s20, 1
    %p216 = por %p214, %p215
    %p218 = scmp.ne.s32.totalorder %s201, %s217
    %p219 = scmp.eq.s32.totalorder %s20, 0
    %p220 = por %p218, %p219
    %p221 = scmp.le.s32.totalorder 1, %s14
    %p222 = scmp.lt.s32.totalorder %s14, 3
    %p223 = pnand %p221, %p222
    %p224 = pneg %p223
    // Predicated region
    $region9: #{resblock_forward.1} parent=5 // pred_check
      _
    $region10: #{resblock_forward.1} parent=5 // pred_check_branch
      %226 = sbr.rel (%p223) target = $region12
    $region11: #{resblock_forward.1} parent=5 // pred_region
      %s227 = ssub.s32 %s14, 1
      // Predicated region
      $region13: #{resblock_forward.1} parent=11 // pred_check
        %p228 = pneg %p61
      $region14: #{resblock_forward.1} parent=11 // pred_check_branch
        %230 = sbr.rel (%p228) target = $region16
      $region15: #{resblock_forward.1} parent=11 // pred_region
        _
      $region16: #{resblock_forward.1} parent=11 // pred_fallthru
        _
      // Predicated region
      $region17: #{resblock_forward.1} parent=11 // pred_check
        %p231 = pneg %p82
      $region18: #{resblock_forward.1} parent=11 // pred_check_branch
        %233 = sbr.rel (%p231) target = $region20
      $region19: #{resblock_forward.1} parent=11 // pred_region
        _
      $region20: #{resblock_forward.1} parent=11 // pred_fallthru
        _
      // Predicated region
      $region21: #{resblock_forward.1} parent=11 // pred_check
        %p234 = pneg %p103
      $region22: #{resblock_forward.1} parent=11 // pred_check_branch
        %236 = sbr.rel (%p234) target = $region24
      $region23: #{resblock_forward.1} parent=11 // pred_region
        _
      $region24: #{resblock_forward.1} parent=11 // pred_fallthru
        _
      // Predicated region
      $region25: #{resblock_forward.1} parent=11 // pred_check
        %p237 = pneg %p124
      $region26: #{resblock_forward.1} parent=11 // pred_check_branch
        %239 = sbr.rel (%p237) target = $region28
      $region27: #{resblock_forward.1} parent=11 // pred_region
        _
      $region28: #{resblock_forward.1} parent=11 // pred_fallthru
        _
      // Predicated region
      $region29: #{resblock_forward.1} parent=11 // pred_check
        %p240 = pneg %p145
      $region30: #{resblock_forward.1} parent=11 // pred_check_branch
        %242 = sbr.rel (%p240) target = $region32
      $region31: #{resblock_forward.1} parent=11 // pred_region
        _
      $region32: #{resblock_forward.1} parent=11 // pred_fallthru
        _
      // Predicated region
      $region33: #{resblock_forward.1} parent=11 // pred_check
        %p243 = pneg %p166
      $region34: #{resblock_forward.1} parent=11 // pred_check_branch
        %245 = sbr.rel (%p243) target = $region36
      $region35: #{resblock_forward.1} parent=11 // pred_region
        _
      $region36: #{resblock_forward.1} parent=11 // pred_fallthru
        _
      // Predicated region
      $region37: #{resblock_forward.1} parent=11 // pred_check
        %p246 = pneg %p187
      $region38: #{resblock_forward.1} parent=11 // pred_check_branch
        %248 = sbr.rel (%p246) target = $region40
      $region39: #{resblock_forward.1} parent=11 // pred_region
        _
      $region40: #{resblock_forward.1} parent=11 // pred_fallthru
        _
    $region12: #{resblock_forward.1} parent=5 // pred_fallthru
      _
    %p249 = scmp.lt.s32.totalorder %s14, 2
    // Predicated region
    $region41: #{resblock_forward.1} parent=5 // pred_check
      %p250 = pneg %p249
    $region42: #{resblock_forward.1} parent=5 // pred_check_branch
      %252 = sbr.rel (%p250) target = $region44
    $region43: #{resblock_forward.1} parent=5 // pred_region
      // Predicated region
      $region45: #{resblock_forward.1} parent=43 // pred_check
        %p253 = pneg %p34
      $region46: #{resblock_forward.1} parent=43 // pred_check_branch
        %255 = sbr.rel (%p253) target = $region48
      $region47: #{resblock_forward.1} parent=43 // pred_region
        %p256 = scmp.lt.s32.totalorder %s14, 1
        %s257 = scalar_select %p256, %s14, 1
        %s258 = smul.addr %s257, 2
        %s259 = smul.addr %s258, 8
        %s260 = scalar_lea.vmem %s0, %s259
      $region48: #{resblock_forward.1} parent=43 // pred_fallthru
        _
    $region44: #{resblock_forward.1} parent=5 // pred_fallthru
      _
    %p261 = scmp.le.s32.totalorder 1, %s14
    %p262 = scmp.lt.s32.totalorder %s14, 3
    %p263 = pnand %p261, %p262
    %p264 = pneg %p263
    // Predicated region
    $region49: #{resblock_forward.1} parent=5 // pred_check
      _
    $region50: #{resblock_forward.1} parent=5 // pred_check_branch
      %266 = sbr.rel (%p263) target = $region52
    $region51: #{resblock_forward.1} parent=5 // pred_region
      %s267 = ssub.s32 %s14, 1
      %p268 = scmp.lt.s32.totalorder %s19, 1
      %s269 = scalar_select %p268, %s19, 1
      %s270 = smul.addr %s269, 2
      %s271 = smul.addr %s270, 8
      %s272 = scalar_lea.vmem %s0, %s271
      %p273 = pneg %p40
      %p274 = pneg %p37
      %p275 = pneg %p61
      %p276 = pneg %p58
      %p277 = pneg %p82
      %p278 = pneg %p79
      %p279 = pneg %p103
      %p280 = pneg %p100
      %p281 = pneg %p124
      %p282 = pneg %p121
      %p283 = pneg %p145
      %p284 = pneg %p142
      %p285 = pneg %p166
      %p286 = pneg %p163
      %p287 = pneg %p187
      %p288 = pneg %p184
      %p289 = pneg %p213
      %p290 = pneg %p210
      %p291 = scmp.lt.s32.totalorder %s19, 1
      %s292 = scalar_select %p291, %s19, 1
      %s293 = smul.addr %s292, 2
      %s294 = smul.addr %s293, 8
      %s295 = scalar_lea.vmem %s8, %s294
      %p296 = scmp.lt.s32.totalorder %s19, 1
      %s297 = scalar_select %p296, %s19, 1
      %s298 = smul.addr %s297, 2
      %s299 = smul.addr %s298, 8
      %s300 = scalar_lea.vmem %s0, %s299
      %p301 = scmp.lt.s32.totalorder %s19, 1
      %s302 = scalar_select %p301, %s19, 1
      %s303 = smul.addr %s302, 2
      %s304 = smul.addr %s303, 8
      %s305 = scalar_lea.vmem %s8, %s304
      %306 = vst [vmem:[#allocation2] sm:$0x1] 0.0
      %307 = vst [vmem:[#allocation2 + $0x11] sm:$0x1] 0.0
      %308 = vst [vmem:[#allocation3] sm:$0x1] 0.0
      %309 = vst [vmem:[#allocation3 + $0x11] sm:$0x1] 0.0
      %v310 = vld [vmem:[%s300] sm:$0xff]
      %v311 = vld [vmem:[%s300 + $0x8] sm:$0xff]
      %v312 = vld [vmem:[%s1] sm:$0x1]
      %v314 = vlaneseq
      %v315 = vshrl.u32 %v314, 7
      %v316 = vsub.s32 0, %v315
      %v317 = vrot.slane %v312, %v316
      %v319 = vmul.f32 %v310, %v317
      %v320 = vmul.f32 %v311, %v317
      %v321 = vld [vmem:[%s2] sm:$0x1]
      %v323 = vlaneseq
      %v324 = vshrl.u32 %v323, 7
      %v325 = vsub.s32 0, %v324
      %v326 = vrot.slane %v321, %v325
      %v328 = vadd.f32 %v319, %v326
      %v329 = vadd.f32 %v320, %v326
      %v330 = vmax.f32 %v328, 0.0
      %v331 = vmax.f32 %v329, 0.0
      %332 = vst [vmem:[#allocation2 + $0x1] sm:$0xff] %v330
      %333 = vst [vmem:[#allocation2 + $0x9] sm:$0xff] %v331
      %v334 = vld [vmem:[#allocation2] sm:$0xff]
      %v335 = vld [vmem:[#allocation2 + $0x8] sm:$0xff]
      %v336 = vld [vmem:[%s3] sm:$0xff]
      %v337 = vld [vmem:[%s3 + $0x8] sm:$0xff]
      %v338 = vld [vmem:[%s3 + $0x10] sm:$0xff]
      %v339 = vld [vmem:[%s3 + $0x18] sm:$0xff]
      %v340 = vld [vmem:[%s3 + $0x20] sm:$0xff]
      %v341 = vld [vmem:[%s3 + $0x28] sm:$0xff]
      %v342 = vld [vmem:[%s3 + $0x30] sm:$0xff]
      %v343 = vld [vmem:[%s3 + $0x38] sm:$0xff]
      %v344 = vld [vmem:[%s3 + $0x40] sm:$0xff]
      %v345 = vld [vmem:[%s3 + $0x48] sm:$0xff]
      %v346 = vld [vmem:[%s3 + $0x50] sm:$0xff]
      %v347 = vld [vmem:[%s3 + $0x58] sm:$0xff]
      %v348 = vld [vmem:[%s3 + $0x60] sm:$0xff]
      %v349 = vld [vmem:[%s3 + $0x68] sm:$0xff]
      %v350 = vld [vmem:[%s3 + $0x70] sm:$0xff]
      %v351 = vld [vmem:[%s3 + $0x78] sm:$0xff]
      %v352 = vld [vmem:[#allocation2 + $0x1] sm:$0xff]
      %v353 = vld [vmem:[#allocation2 + $0x9] sm:$0xff]
      %s354 = scalar_lea.vmem %s3, 128
      %v355 = vld [vmem:[%s354] sm:$0xff]
      %v356 = vld [vmem:[%s354 + $0x8] sm:$0xff]
      %v357 = vld [vmem:[%s354 + $0x10] sm:$0xff]
      %v358 = vld [vmem:[%s354 + $0x18] sm:$0xff]
      %v359 = vld [vmem:[%s354 + $0x20] sm:$0xff]
      %v360 = vld [vmem:[%s354 + $0x28] sm:$0xff]
      %v361 = vld [vmem:[%s354 + $0x30] sm:$0xff]
      %v362 = vld [vmem:[%s354 + $0x38] sm:$0xff]
      %v363 = vld [vmem:[%s354 + $0x40] sm:$0xff]
      %v364 = vld [vmem:[%s354 + $0x48] sm:$0xff]
      %v365 = vld [vmem:[%s354 + $0x50] sm:$0xff]
      %v366 = vld [vmem:[%s354 + $0x58] sm:$0xff]
      %v367 = vld [vmem:[%s354 + $0x60] sm:$0xff]
      %v368 = vld [vmem:[%s354 + $0x68] sm:$0xff]
      %v369 = vld [vmem:[%s354 + $0x70] sm:$0xff]
      %v370 = vld [vmem:[%s354 + $0x78] sm:$0xff]
      %371 = vmatprep.subr.mxu0 0.0
      %372 = vmatpush1.msra.mxu0 %v355
      %373 = vmatprep.subr.mxu0 0.0
      %374 = vmatpush1.msra.mxu0 %v356
      %375 = vmatprep.subr.mxu0 0.0
      %376 = vmatpush1.msra.mxu0 %v357
      %377 = vmatprep.subr.mxu0 0.0
      %378 = vmatpush1.msra.mxu0 %v358
      %379 = vmatprep.subr.mxu0 0.0
      %380 = vmatpush1.msra.mxu0 %v359
      %381 = vmatprep.subr.mxu0 0.0
      %382 = vmatpush1.msra.mxu0 %v360
      %383 = vmatprep.subr.mxu0 0.0
      %384 = vmatpush1.msra.mxu0 %v361
      %385 = vmatprep.subr.mxu0 0.0
      %386 = vmatpush1.msra.mxu0 %v362
      %387 = vmatprep.subr.mxu0 0.0
      %388 = vmatpush1.msra.mxu0 %v363
      %389 = vmatprep.subr.mxu0 0.0
      %390 = vmatpush1.msra.mxu0 %v364
      %391 = vmatprep.subr.mxu0 0.0
      %392 = vmatpush1.msra.mxu0 %v365
      %393 = vmatprep.subr.mxu0 0.0
      %394 = vmatpush1.msra.mxu0 %v366
      %395 = vmatprep.subr.mxu0 0.0
      %396 = vmatpush1.msra.mxu0 %v367
      %397 = vmatprep.subr.mxu0 0.0
      %398 = vmatpush1.msra.mxu0 %v368
      %399 = vmatprep.subr.mxu0 0.0
      %400 = vmatpush1.msra.mxu0 %v369
      %401 = vmatprep.subr.mxu0 0.0
      %402 = vmatpush1.msra.mxu0 %v370
      %403 = vmatprep.subr.mxu0 0.0
      %404 = vmatpush1.msra.mxu0 0.0
      %405 = vmatprep.subr.mxu0 0.0
      %406 = vmatpush1.msra.mxu0 0.0
      %407 = vmatprep.subr.mxu0 0.0
      %408 = vmatpush1.msra.mxu0 0.0
      %409 = vmatprep.subr.mxu0 0.0
      %410 = vmatpush1.msra.mxu0 0.0
      %411 = vmatprep.subr.mxu0 0.0
      %412 = vmatpush1.msra.mxu0 0.0
      %413 = vmatprep.subr.mxu0 0.0
      %414 = vmatpush1.msra.mxu0 0.0
      %415 = vmatprep.subr.mxu0 0.0
      %416 = vmatpush1.msra.mxu0 0.0
      %417 = vmatprep.subr.mxu0 0.0
      %418 = vmatpush1.msra.mxu0 0.0
      %419 = vmatprep.subr.mxu0 0.0
      %420 = vmatpush1.msra.mxu0 0.0
      %421 = vmatprep.subr.mxu0 0.0
      %422 = vmatpush1.msra.mxu0 0.0
      %423 = vmatprep.subr.mxu0 0.0
      %424 = vmatpush1.msra.mxu0 0.0
      %425 = vmatprep.subr.mxu0 0.0
      %426 = vmatpush1.msra.mxu0 0.0
      %427 = vmatprep.subr.mxu0 0.0
      %428 = vmatpush1.msra.mxu0 0.0
      %429 = vmatprep.subr.mxu0 0.0
      %430 = vmatpush1.msra.mxu0 0.0
      %431 = vmatprep.subr.mxu0 0.0
      %432 = vmatpush1.msra.mxu0 0.0
      %433 = vmatprep.subr.mxu0 0.0
      %434 = vmatpush1.msra.mxu0 0.0
      %435 = vmatprep.mubr.f32.mxu0 0.0
      %436 = vmatmul.mubr.f32.gmra.mrb[0].mxu0 %v352
      %v437 = vpop.f32.mrb[0].mxu0
      %v438 = vadd.f32 0.0, %v437
      %v439 = vpop.f32.mrb[0].mxu0
      %440 = vmatprep.mubr.f32.mxu0 0.0
      %441 = vmatmul.mubr.f32.gmra.mrb[0].mxu0 %v353
      %v442 = vpop.f32.mrb[0].mxu0
      %v443 = vadd.f32 0.0, %v442
      %v444 = vpop.f32.mrb[0].mxu0
      %445 = vdwg.mxu0
      %446 = vmatprep.subr.mxu0 0.0
      %447 = vmatpush1.msra.mxu0 %v336
      %448 = vmatprep.subr.mxu0 0.0
      %449 = vmatpush1.msra.mxu0 %v337
      %450 = vmatprep.subr.mxu0 0.0
      %451 = vmatpush1.msra.mxu0 %v338
      %452 = vmatprep.subr.mxu0 0.0
      %453 = vmatpush1.msra.mxu0 %v339
      %454 = vmatprep.subr.mxu0 0.0
      %455 = vmatpush1.msra.mxu0 %v340
      %456 = vmatprep.subr.mxu0 0.0
      %457 = vmatpush1.msra.mxu0 %v341
      %458 = vmatprep.subr.mxu0 0.0
      %459 = vmatpush1.msra.mxu0 %v342
      %460 = vmatprep.subr.mxu0 0.0
      %461 = vmatpush1.msra.mxu0 %v343
      %462 = vmatprep.subr.mxu0 0.0
      %463 = vmatpush1.msra.mxu0 %v344
      %464 = vmatprep.subr.mxu0 0.0
      %465 = vmatpush1.msra.mxu0 %v345
      %466 = vmatprep.subr.mxu0 0.0
      %467 = vmatpush1.msra.mxu0 %v346
      %468 = vmatprep.subr.mxu0 0.0
      %469 = vmatpush1.msra.mxu0 %v347
      %470 = vmatprep.subr.mxu0 0.0
      %471 = vmatpush1.msra.mxu0 %v348
      %472 = vmatprep.subr.mxu0 0.0
      %473 = vmatpush1.msra.mxu0 %v349
      %474 = vmatprep.subr.mxu0 0.0
      %475 = vmatpush1.msra.mxu0 %v350
      %476 = vmatprep.subr.mxu0 0.0
      %477 = vmatpush1.msra.mxu0 %v351
      %478 = vmatprep.subr.mxu0 0.0
      %479 = vmatpush1.msra.mxu0 0.0
      %480 = vmatprep.subr.mxu0 0.0
      %481 = vmatpush1.msra.mxu0 0.0
      %482 = vmatprep.subr.mxu0 0.0
      %483 = vmatpush1.msra.mxu0 0.0
      %484 = vmatprep.subr.mxu0 0.0
      %485 = vmatpush1.msra.mxu0 0.0
      %486 = vmatprep.subr.mxu0 0.0
      %487 = vmatpush1.msra.mxu0 0.0
      %488 = vmatprep.subr.mxu0 0.0
      %489 = vmatpush1.msra.mxu0 0.0
      %490 = vmatprep.subr.mxu0 0.0
      %491 = vmatpush1.msra.mxu0 0.0
      %492 = vmatprep.subr.mxu0 0.0
      %493 = vmatpush1.msra.mxu0 0.0
      %494 = vmatprep.subr.mxu0 0.0
      %495 = vmatpush1.msra.mxu0 0.0
      %496 = vmatprep.subr.mxu0 0.0
      %497 = vmatpush1.msra.mxu0 0.0
      %498 = vmatprep.subr.mxu0 0.0
      %499 = vmatpush1.msra.mxu0 0.0
      %500 = vmatprep.subr.mxu0 0.0
      %501 = vmatpush1.msra.mxu0 0.0
      %502 = vmatprep.subr.mxu0 0.0
      %503 = vmatpush1.msra.mxu0 0.0
      %504 = vmatprep.subr.mxu0 0.0
      %505 = vmatpush1.msra.mxu0 0.0
      %506 = vmatprep.subr.mxu0 0.0
      %507 = vmatpush1.msra.mxu0 0.0
      %508 = vmatprep.subr.mxu0 0.0
      %509 = vmatpush1.msra.mxu0 0.0
      %510 = vmatprep.mubr.f32.mxu0 0.0
      %511 = vmatmul.mubr.f32.gmra.mrb[0].mxu0 %v334
      %v512 = vpop.f32.mrb[0].mxu0
      %v513 = vadd.f32 %v438, %v512
      %v514 = vpop.f32.mrb[0].mxu0
      %515 = vmatprep.mubr.f32.mxu0 0.0
      %516 = vmatmul.mubr.f32.gmra.mrb[0].mxu0 %v335
      %v517 = vpop.f32.mrb[0].mxu0
      %v518 = vadd.f32 %v443, %v517
      %v519 = vpop.f32.mrb[0].mxu0
      %520 = vdwg.mxu0
      %v521 = vld [vmem:[#allocation2 + $0x2] sm:$0xff]
      %v522 = vld [vmem:[#allocation2 + $0xa] sm:$0xff]
      %s523 = scalar_lea.vmem %s3, 256
      %v524 = vld [vmem:[%s523] sm:$0xff]
      %v525 = vld [vmem:[%s523 + $0x8] sm:$0xff]
      %v526 = vld [vmem:[%s523 + $0x10] sm:$0xff]
      %v527 = vld [vmem:[%s523 + $0x18] sm:$0xff]
      %v528 = vld [vmem:[%s523 + $0x20] sm:$0xff]
      %v529 = vld [vmem:[%s523 + $0x28] sm:$0xff]
      %v530 = vld [vmem:[%s523 + $0x30] sm:$0xff]
      %v531 = vld [vmem:[%s523 + $0x38] sm:$0xff]
      %v532 = vld [vmem:[%s523 + $0x40] sm:$0xff]
      %v533 = vld [vmem:[%s523 + $0x48] sm:$0xff]
      %v534 = vld [vmem:[%s523 + $0x50] sm:$0xff]
      %v535 = vld [vmem:[%s523 + $0x58] sm:$0xff]
      %v536 = vld [vmem:[%s523 + $0x60] sm:$0xff]
      %v537 = vld [vmem:[%s523 + $0x68] sm:$0xff]
      %v538 = vld [vmem:[%s523 + $0x70] sm:$0xff]
      %v539 = vld [vmem:[%s523 + $0x78] sm:$0xff]
      %540 = vmatprep.subr.mxu0 0.0
      %541 = vmatpush1.msra.mxu0 %v524
      %542 = vmatprep.subr.mxu0 0.0
      %543 = vmatpush1.msra.mxu0 %v525
      %544 = vmatprep.subr.mxu0 0.0
      %545 = vmatpush1.msra.mxu0 %v526
      %546 = vmatprep.subr.mxu0 0.0
      %547 = vmatpush1.msra.mxu0 %v527
      %548 = vmatprep.subr.mxu0 0.0
      %549 = vmatpush1.msra.mxu0 %v528
      %550 = vmatprep.subr.mxu0 0.0
      %551 = vmatpush1.msra.mxu0 %v529
      %552 = vmatprep.subr.mxu0 0.0
      %553 = vmatpush1.msra.mxu0 %v530
      %554 = vmatprep.subr.mxu0 0.0
      %555 = vmatpush1.msra.mxu0 %v531
      %556 = vmatprep.subr.mxu0 0.0
      %557 = vmatpush1.msra.mxu0 %v532
      %558 = vmatprep.subr.mxu0 0.0
      %559 = vmatpush1.msra.mxu0 %v533
      %560 = vmatprep.subr.mxu0 0.0
      %561 = vmatpush1.msra.mxu0 %v534
      %562 = vmatprep.subr.mxu0 0.0
      %563 = vmatpush1.msra.mxu0 %v535
      %564 = vmatprep.subr.mxu0 0.0
      %565 = vmatpush1.msra.mxu0 %v536
      %566 = vmatprep.subr.mxu0 0.0
      %567 = vmatpush1.msra.mxu0 %v537
      %568 = vmatprep.subr.mxu0 0.0
      %569 = vmatpush1.msra.mxu0 %v538
      %570 = vmatprep.subr.mxu0 0.0
      %571 = vmatpush1.msra.mxu0 %v539
      %572 = vmatprep.subr.mxu0 0.0
      %573 = vmatpush1.msra.mxu0 0.0
      %574 = vmatprep.subr.mxu0 0.0
      %575 = vmatpush1.msra.mxu0 0.0
      %576 = vmatprep.subr.mxu0 0.0
      %577 = vmatpush1.msra.mxu0 0.0
      %578 = vmatprep.subr.mxu0 0.0
      %579 = vmatpush1.msra.mxu0 0.0
      %580 = vmatprep.subr.mxu0 0.0
      %581 = vmatpush1.msra.mxu0 0.0
      %582 = vmatprep.subr.mxu0 0.0
      %583 = vmatpush1.msra.mxu0 0.0
      %584 = vmatprep.subr.mxu0 0.0
      %585 = vmatpush1.msra.mxu0 0.0
      %586 = vmatprep.subr.mxu0 0.0
      %587 = vmatpush1.msra.mxu0 0.0
      %588 = vmatprep.subr.mxu0 0.0
      %589 = vmatpush1.msra.mxu0 0.0
      %590 = vmatprep.subr.mxu0 0.0
      %591 = vmatpush1.msra.mxu0 0.0
      %592 = vmatprep.subr.mxu0 0.0
      %593 = vmatpush1.msra.mxu0 0.0
      %594 = vmatprep.subr.mxu0 0.0
      %595 = vmatpush1.msra.mxu0 0.0
      %596 = vmatprep.subr.mxu0 0.0
      %597 = vmatpush1.msra.mxu0 0.0
      %598 = vmatprep.subr.mxu0 0.0
      %599 = vmatpush1.msra.mxu0 0.0
      %600 = vmatprep.subr.mxu0 0.0
      %601 = vmatpush1.msra.mxu0 0.0
      %602 = vmatprep.subr.mxu0 0.0
      %603 = vmatpush1.msra.mxu0 0.0
      %604 = vmatprep.mubr.f32.mxu0 0.0
      %605 = vmatmul.mubr.f32.gmra.mrb[0].mxu0 %v521
      %v606 = vpop.f32.mrb[0].mxu0
      %v607 = vadd.f32 0.0, %v606
      %v608 = vpop.f32.mrb[0].mxu0
      %609 = vmatprep.mubr.f32.mxu0 0.0
      %610 = vmatmul.mubr.f32.gmra.mrb[0].mxu0 %v522
      %v611 = vpop.f32.mrb[0].mxu0
      %v612 = vadd.f32 0.0, %v611
      %v613 = vpop.f32.mrb[0].mxu0
      %614 = vdwg.mxu0
      %v615 = vadd.f32 %v513, %v607
      %v616 = vadd.f32 %v518, %v612
      %v617 = vld [vmem:[%s4] sm:$0x1]
      %v619 = vlaneseq
      %v620 = vshrl.u32 %v619, 7
      %v621 = vsub.s32 0, %v620
      %v622 = vrot.slane %v617, %v621
      %v624 = vmul.f32 %v615, %v622
      %v625 = vmul.f32 %v616, %v622
      %v626 = vld [vmem:[%s5] sm:$0x1]
      %v628 = vlaneseq
      %v629 = vshrl.u32 %v628, 7
      %v630 = vsub.s32 0, %v629
      %v631 = vrot.slane %v626, %v630
      %v633 = vadd.f32 %v624, %v631
      %v634 = vadd.f32 %v625, %v631
      %v635 = vmax.f32 %v633, 0.0
      %v636 = vmax.f32 %v634, 0.0
      %637 = vst [vmem:[#allocation3 + $0x1] sm:$0xff] %v635
      %638 = vst [vmem:[#allocation3 + $0x9] sm:$0xff] %v636
      %v639 = vld [vmem:[#allocation3] sm:$0xff]
      %v640 = vld [vmem:[#allocation3 + $0x8] sm:$0xff]
      %v641 = vld [vmem:[%s6] sm:$0xff]
      %v642 = vld [vmem:[%s6 + $0x8] sm:$0xff]
      %v643 = vld [vmem:[%s6 + $0x10] sm:$0xff]
      %v644 = vld [vmem:[%s6 + $0x18] sm:$0xff]
      %v645 = vld [vmem:[%s6 + $0x20] sm:$0xff]
      %v646 = vld [vmem:[%s6 + $0x28] sm:$0xff]
      %v647 = vld [vmem:[%s6 + $0x30] sm:$0xff]
      %v648 = vld [vmem:[%s6 + $0x38] sm:$0xff]
      %v649 = vld [vmem:[%s6 + $0x40] sm:$0xff]
      %v650 = vld [vmem:[%s6 + $0x48] sm:$0xff]
      %v651 = vld [vmem:[%s6 + $0x50] sm:$0xff]
      %v652 = vld [vmem:[%s6 + $0x58] sm:$0xff]
      %v653 = vld [vmem:[%s6 + $0x60] sm:$0xff]
      %v654 = vld [vmem:[%s6 + $0x68] sm:$0xff]
      %v655 = vld [vmem:[%s6 + $0x70] sm:$0xff]
      %v656 = vld [vmem:[%s6 + $0x78] sm:$0xff]
      %v657 = vld [vmem:[#allocation3 + $0x1] sm:$0xff]
      %v658 = vld [vmem:[#allocation3 + $0x9] sm:$0xff]
      %s659 = scalar_lea.vmem %s6, 128
      %v660 = vld [vmem:[%s659] sm:$0xff]
      %v661 = vld [vmem:[%s659 + $0x8] sm:$0xff]
      %v662 = vld [vmem:[%s659 + $0x10] sm:$0xff]
      %v663 = vld [vmem:[%s659 + $0x18] sm:$0xff]
      %v664 = vld [vmem:[%s659 + $0x20] sm:$0xff]
      %v665 = vld [vmem:[%s659 + $0x28] sm:$0xff]
      %v666 = vld [vmem:[%s659 + $0x30] sm:$0xff]
      %v667 = vld [vmem:[%s659 + $0x38] sm:$0xff]
      %v668 = vld [vmem:[%s659 + $0x40] sm:$0xff]
      %v669 = vld [vmem:[%s659 + $0x48] sm:$0xff]
      %v670 = vld [vmem:[%s659 + $0x50] sm:$0xff]
      %v671 = vld [vmem:[%s659 + $0x58] sm:$0xff]
      %v672 = vld [vmem:[%s659 + $0x60] sm:$0xff]
      %v673 = vld [vmem:[%s659 + $0x68] sm:$0xff]
      %v674 = vld [vmem:[%s659 + $0x70] sm:$0xff]
      %v675 = vld [vmem:[%s659 + $0x78] sm:$0xff]
      %676 = vmatprep.subr.mxu0 0.0
      %677 = vmatpush1.msra.mxu0 %v660
      %678 = vmatprep.subr.mxu0 0.0
      %679 = vmatpush1.msra.mxu0 %v661
      %680 = vmatprep.subr.mxu0 0.0
      %681 = vmatpush1.msra.mxu0 %v662
      %682 = vmatprep.subr.mxu0 0.0
      %683 = vmatpush1.msra.mxu0 %v663
      %684 = vmatprep.subr.mxu0 0.0
      %685 = vmatpush1.msra.mxu0 %v664
      %686 = vmatprep.subr.mxu0 0.0
      %687 = vmatpush1.msra.mxu0 %v665
      %688 = vmatprep.subr.mxu0 0.0
      %689 = vmatpush1.msra.mxu0 %v666
      %690 = vmatprep.subr.mxu0 0.0
      %691 = vmatpush1.msra.mxu0 %v667
      %692 = vmatprep.subr.mxu0 0.0
      %693 = vmatpush1.msra.mxu0 %v668
      %694 = vmatprep.subr.mxu0 0.0
      %695 = vmatpush1.msra.mxu0 %v669
      %696 = vmatprep.subr.mxu0 0.0
      %697 = vmatpush1.msra.mxu0 %v670
      %698 = vmatprep.subr.mxu0 0.0
      %699 = vmatpush1.msra.mxu0 %v671
      %700 = vmatprep.subr.mxu0 0.0
      %701 = vmatpush1.msra.mxu0 %v672
      %702 = vmatprep.subr.mxu0 0.0
      %703 = vmatpush1.msra.mxu0 %v673
      %704 = vmatprep.subr.mxu0 0.0
      %705 = vmatpush1.msra.mxu0 %v674
      %706 = vmatprep.subr.mxu0 0.0
      %707 = vmatpush1.msra.mxu0 %v675
      %708 = vmatprep.subr.mxu0 0.0
      %709 = vmatpush1.msra.mxu0 0.0
      %710 = vmatprep.subr.mxu0 0.0
      %711 = vmatpush1.msra.mxu0 0.0
      %712 = vmatprep.subr.mxu0 0.0
      %713 = vmatpush1.msra.mxu0 0.0
      %714 = vmatprep.subr.mxu0 0.0
      %715 = vmatpush1.msra.mxu0 0.0
      %716 = vmatprep.subr.mxu0 0.0
      %717 = vmatpush1.msra.mxu0 0.0
      %718 = vmatprep.subr.mxu0 0.0
      %719 = vmatpush1.msra.mxu0 0.0
      %720 = vmatprep.subr.mxu0 0.0
      %721 = vmatpush1.msra.mxu0 0.0
      %722 = vmatprep.subr.mxu0 0.0
      %723 = vmatpush1.msra.mxu0 0.0
      %724 = vmatprep.subr.mxu0 0.0
      %725 = vmatpush1.msra.mxu0 0.0
      %726 = vmatprep.subr.mxu0 0.0
      %727 = vmatpush1.msra.mxu0 0.0
      %728 = vmatprep.subr.mxu0 0.0
      %729 = vmatpush1.msra.mxu0 0.0
      %730 = vmatprep.subr.mxu0 0.0
      %731 = vmatpush1.msra.mxu0 0.0
      %732 = vmatprep.subr.mxu0 0.0
      %733 = vmatpush1.msra.mxu0 0.0
      %734 = vmatprep.subr.mxu0 0.0
      %735 = vmatpush1.msra.mxu0 0.0
      %736 = vmatprep.subr.mxu0 0.0
      %737 = vmatpush1.msra.mxu0 0.0
      %738 = vmatprep.subr.mxu0 0.0
      %739 = vmatpush1.msra.mxu0 0.0
      %740 = vmatprep.mubr.f32.mxu0 0.0
      %741 = vmatmul.mubr.f32.gmra.mrb[0].mxu0 %v657
      %v742 = vpop.f32.mrb[0].mxu0
      %v743 = vadd.f32 0.0, %v742
      %v744 = vpop.f32.mrb[0].mxu0
      %745 = vmatprep.mubr.f32.mxu0 0.0
      %746 = vmatmul.mubr.f32.gmra.mrb[0].mxu0 %v658
      %v747 = vpop.f32.mrb[0].mxu0
      %v748 = vadd.f32 0.0, %v747
      %v749 = vpop.f32.mrb[0].mxu0
      %750 = vdwg.mxu0
      %751 = vmatprep.subr.mxu0 0.0
      %752 = vmatpush1.msra.mxu0 %v641
      %753 = vmatprep.subr.mxu0 0.0
      %754 = vmatpush1.msra.mxu0 %v642
      %755 = vmatprep.subr.mxu0 0.0
      %756 = vmatpush1.msra.mxu0 %v643
      %757 = vmatprep.subr.mxu0 0.0
      %758 = vmatpush1.msra.mxu0 %v644
      %759 = vmatprep.subr.mxu0 0.0
      %760 = vmatpush1.msra.mxu0 %v645
      %761 = vmatprep.subr.mxu0 0.0
      %762 = vmatpush1.msra.mxu0 %v646
      %763 = vmatprep.subr.mxu0 0.0
      %764 = vmatpush1.msra.mxu0 %v647
      %765 = vmatprep.subr.mxu0 0.0
      %766 = vmatpush1.msra.mxu0 %v648
      %767 = vmatprep.subr.mxu0 0.0
      %768 = vmatpush1.msra.mxu0 %v649
      %769 = vmatprep.subr.mxu0 0.0
      %770 = vmatpush1.msra.mxu0 %v650
      %771 = vmatprep.subr.mxu0 0.0
      %772 = vmatpush1.msra.mxu0 %v651
      %773 = vmatprep.subr.mxu0 0.0
      %774 = vmatpush1.msra.mxu0 %v652
      %775 = vmatprep.subr.mxu0 0.0
      %776 = vmatpush1.msra.mxu0 %v653
      %777 = vmatprep.subr.mxu0 0.0
      %778 = vmatpush1.msra.mxu0 %v654
      %779 = vmatprep.subr.mxu0 0.0
      %780 = vmatpush1.msra.mxu0 %v655
      %781 = vmatprep.subr.mxu0 0.0
      %782 = vmatpush1.msra.mxu0 %v656
      %783 = vmatprep.subr.mxu0 0.0
      %784 = vmatpush1.msra.mxu0 0.0
      %785 = vmatprep.subr.mxu0 0.0
      %786 = vmatpush1.msra.mxu0 0.0
      %787 = vmatprep.subr.mxu0 0.0
      %788 = vmatpush1.msra.mxu0 0.0
      %789 = vmatprep.subr.mxu0 0.0
      %790 = vmatpush1.msra.mxu0 0.0
      %791 = vmatprep.subr.mxu0 0.0
      %792 = vmatpush1.msra.mxu0 0.0
      %793 = vmatprep.subr.mxu0 0.0
      %794 = vmatpush1.msra.mxu0 0.0
      %795 = vmatprep.subr.mxu0 0.0
      %796 = vmatpush1.msra.mxu0 0.0
      %797 = vmatprep.subr.mxu0 0.0
      %798 = vmatpush1.msra.mxu0 0.0
      %799 = vmatprep.subr.mxu0 0.0
      %800 = vmatpush1.msra.mxu0 0.0
      %801 = vmatprep.subr.mxu0 0.0
      %802 = vmatpush1.msra.mxu0 0.0
      %803 = vmatprep.subr.mxu0 0.0
      %804 = vmatpush1.msra.mxu0 0.0
      %805 = vmatprep.subr.mxu0 0.0
      %806 = vmatpush1.msra.mxu0 0.0
      %807 = vmatprep.subr.mxu0 0.0
      %808 = vmatpush1.msra.mxu0 0.0
      %809 = vmatprep.subr.mxu0 0.0
      %810 = vmatpush1.msra.mxu0 0.0
      %811 = vmatprep.subr.mxu0 0.0
      %812 = vmatpush1.msra.mxu0 0.0
      %813 = vmatprep.subr.mxu0 0.0
      %814 = vmatpush1.msra.mxu0 0.0
      %815 = vmatprep.mubr.f32.mxu0 0.0
      %816 = vmatmul.mubr.f32.gmra.mrb[0].mxu0 %v639
      %v817 = vpop.f32.mrb[0].mxu0
      %v818 = vadd.f32 %v743, %v817
      %v819 = vpop.f32.mrb[0].mxu0
      %820 = vmatprep.mubr.f32.mxu0 0.0
      %821 = vmatmul.mubr.f32.gmra.mrb[0].mxu0 %v640
      %v822 = vpop.f32.mrb[0].mxu0
      %v823 = vadd.f32 %v748, %v822
      %v824 = vpop.f32.mrb[0].mxu0
      %825 = vdwg.mxu0
      %v826 = vld [vmem:[#allocation3 + $0x2] sm:$0xff]
      %v827 = vld [vmem:[#allocation3 + $0xa] sm:$0xff]
      %s828 = scalar_lea.vmem %s6, 256
      %v829 = vld [vmem:[%s828] sm:$0xff]
      %v830 = vld [vmem:[%s828 + $0x8] sm:$0xff]
      %v831 = vld [vmem:[%s828 + $0x10] sm:$0xff]
      %v832 = vld [vmem:[%s828 + $0x18] sm:$0xff]
      %v833 = vld [vmem:[%s828 + $0x20] sm:$0xff]
      %v834 = vld [vmem:[%s828 + $0x28] sm:$0xff]
      %v835 = vld [vmem:[%s828 + $0x30] sm:$0xff]
      %v836 = vld [vmem:[%s828 + $0x38] sm:$0xff]
      %v837 = vld [vmem:[%s828 + $0x40] sm:$0xff]
      %v838 = vld [vmem:[%s828 + $0x48] sm:$0xff]
      %v839 = vld [vmem:[%s828 + $0x50] sm:$0xff]
      %v840 = vld [vmem:[%s828 + $0x58] sm:$0xff]
      %v841 = vld [vmem:[%s828 + $0x60] sm:$0xff]
      %v842 = vld [vmem:[%s828 + $0x68] sm:$0xff]
      %v843 = vld [vmem:[%s828 + $0x70] sm:$0xff]
      %v844 = vld [vmem:[%s828 + $0x78] sm:$0xff]
      %845 = vmatprep.subr.mxu0 0.0
      %846 = vmatpush1.msra.mxu0 %v829
      %847 = vmatprep.subr.mxu0 0.0
      %848 = vmatpush1.msra.mxu0 %v830
      %849 = vmatprep.subr.mxu0 0.0
      %850 = vmatpush1.msra.mxu0 %v831
      %851 = vmatprep.subr.mxu0 0.0
      %852 = vmatpush1.msra.mxu0 %v832
      %853 = vmatprep.subr.mxu0 0.0
      %854 = vmatpush1.msra.mxu0 %v833
      %855 = vmatprep.subr.mxu0 0.0
      %856 = vmatpush1.msra.mxu0 %v834
      %857 = vmatprep.subr.mxu0 0.0
      %858 = vmatpush1.msra.mxu0 %v835
      %859 = vmatprep.subr.mxu0 0.0
      %860 = vmatpush1.msra.mxu0 %v836
      %861 = vmatprep.subr.mxu0 0.0
      %862 = vmatpush1.msra.mxu0 %v837
      %863 = vmatprep.subr.mxu0 0.0
      %864 = vmatpush1.msra.mxu0 %v838
      %865 = vmatprep.subr.mxu0 0.0
      %866 = vmatpush1.msra.mxu0 %v839
      %867 = vmatprep.subr.mxu0 0.0
      %868 = vmatpush1.msra.mxu0 %v840
      %869 = vmatprep.subr.mxu0 0.0
      %870 = vmatpush1.msra.mxu0 %v841
      %871 = vmatprep.subr.mxu0 0.0
      %872 = vmatpush1.msra.mxu0 %v842
      %873 = vmatprep.subr.mxu0 0.0
      %874 = vmatpush1.msra.mxu0 %v843
      %875 = vmatprep.subr.mxu0 0.0
      %876 = vmatpush1.msra.mxu0 %v844
      %877 = vmatprep.subr.mxu0 0.0
      %878 = vmatpush1.msra.mxu0 0.0
      %879 = vmatprep.subr.mxu0 0.0
      %880 = vmatpush1.msra.mxu0 0.0
      %881 = vmatprep.subr.mxu0 0.0
      %882 = vmatpush1.msra.mxu0 0.0
      %883 = vmatprep.subr.mxu0 0.0
      %884 = vmatpush1.msra.mxu0 0.0
      %885 = vmatprep.subr.mxu0 0.0
      %886 = vmatpush1.msra.mxu0 0.0
      %887 = vmatprep.subr.mxu0 0.0
      %888 = vmatpush1.msra.mxu0 0.0
      %889 = vmatprep.subr.mxu0 0.0
      %890 = vmatpush1.msra.mxu0 0.0
      %891 = vmatprep.subr.mxu0 0.0
      %892 = vmatpush1.msra.mxu0 0.0
      %893 = vmatprep.subr.mxu0 0.0
      %894 = vmatpush1.msra.mxu0 0.0
      %895 = vmatprep.subr.mxu0 0.0
      %896 = vmatpush1.msra.mxu0 0.0
      %897 = vmatprep.subr.mxu0 0.0
      %898 = vmatpush1.msra.mxu0 0.0
      %899 = vmatprep.subr.mxu0 0.0
      %900 = vmatpush1.msra.mxu0 0.0
      %901 = vmatprep.subr.mxu0 0.0
      %902 = vmatpush1.msra.mxu0 0.0
      %903 = vmatprep.subr.mxu0 0.0
      %904 = vmatpush1.msra.mxu0 0.0
      %905 = vmatprep.subr.mxu0 0.0
      %906 = vmatpush1.msra.mxu0 0.0
      %907 = vmatprep.subr.mxu0 0.0
      %908 = vmatpush1.msra.mxu0 0.0
      %909 = vmatprep.mubr.f32.mxu0 0.0
      %910 = vmatmul.mubr.f32.gmra.mrb[0].mxu0 %v826
      %v911 = vpop.f32.mrb[0].mxu0
      %v912 = vadd.f32 0.0, %v911
      %v913 = vpop.f32.mrb[0].mxu0
      %914 = vmatprep.mubr.f32.mxu0 0.0
      %915 = vmatmul.mubr.f32.gmra.mrb[0].mxu0 %v827
      %v916 = vpop.f32.mrb[0].mxu0
      %v917 = vadd.f32 0.0, %v916
      %v918 = vpop.f32.mrb[0].mxu0
      %919 = vdwg.mxu0
      %v920 = vadd.f32 %v818, %v912
      %v921 = vadd.f32 %v823, %v917
      %v922 = vld [vmem:[%s7] sm:$0x1]
      %v924 = vlaneseq
      %v925 = vshrl.u32 %v924, 7
      %v926 = vsub.s32 0, %v925
      %v927 = vrot.slane %v922, %v926
      %v929 = vadd.f32 %v920, %v927
      %v930 = vadd.f32 %v921, %v927
      %v931 = vadd.f32 %v929, %v310
      %v932 = vadd.f32 %v930, %v311
      %933 = vst [vmem:[%s305] sm:$0xff] %v931
      %934 = vst [vmem:[%s305 + $0x8] sm:$0xff] %v932
      %p935 = scmp.lt.s32.totalorder %s19, 1
      %s936 = scalar_select %p935, %s19, 1
      %s937 = smul.addr %s936, 2
      %s938 = smul.addr %s937, 8
      %s939 = scalar_lea.vmem %s8, %s938
      // Predicated region
      $region53: #{resblock_forward.1} parent=51 // pred_check
        %p940 = pneg %p210
      $region54: #{resblock_forward.1} parent=51 // pred_check_branch
        %942 = sbr.rel (%p940) target = $region56
      $region55: #{resblock_forward.1} parent=51 // pred_region
        _
      $region56: #{resblock_forward.1} parent=51 // pred_fallthru
        _
    $region52: #{resblock_forward.1} parent=5 // pred_fallthru
      _
    %p943 = scmp.le.s32.totalorder 2, %s14
    // Predicated region
    $region57: #{resblock_forward.1} parent=5 // pred_check
      %p944 = pneg %p943
    $region58: #{resblock_forward.1} parent=5 // pred_check_branch
      %946 = sbr.rel (%p944) target = $region60
    $region59: #{resblock_forward.1} parent=5 // pred_region
      %s947 = ssub.s32 %s14, 2
      // Predicated region
      $region61: #{resblock_forward.1} parent=59 // pred_check
        %p948 = pneg %p216
      $region62: #{resblock_forward.1} parent=59 // pred_check_branch
        %950 = sbr.rel (%p948) target = $region64
      $region63: #{resblock_forward.1} parent=59 // pred_region
        %p951 = scmp.lt.s32.totalorder %s20, 1
        %s952 = scalar_select %p951, %s20, 1
        %s953 = smul.addr %s952, 2
        %s954 = smul.addr %s953, 8
        %s955 = scalar_lea.vmem %s8, %s954
      $region64: #{resblock_forward.1} parent=59 // pred_fallthru
        _
    $region60: #{resblock_forward.1} parent=5 // pred_fallthru
      _
  $region6: #{resblock_forward.1} parent=0 // loop_footer
    %s18 = sadd.s32 1, %s14
  $region7: #{resblock_forward.1} parent=0 // loop_footer_branch
    %13 = sbr.rel target = $region3
  $region8: #{resblock_forward.1} parent=0 // loop_exit
    _

</llo_original>
